<compile_context>
chip_gen: v7x
topology: tpu7x:2x2x1
jax: 0.10.0
libtpu: 0.0.40
codegen_flags: <defaults>
</compile_context>

<pallas_src>
import functools

import jax
import jax.numpy as jnp
from jax.experimental import pallas as pl
from jax.experimental.pallas import tpu as pltpu

_LANE = 128
_SUBLANE = 8


def _round_up(n, m):
    return ((n + m - 1) // m) * m


def decoder_kernel(x_ref, w1_ref, b1_ref, w2_ref, b2_ref, o_ref):
    # Linear 1 on the MXU (f32 accumulation); bias + ReLU epilogue in f32.
    x = x_ref[...]
    h = jnp.dot(x, w1_ref[...], preferred_element_type=jnp.float32)
    h = jnp.maximum(h + b1_ref[...], 0.0)
    # Linear 2 on the MXU (f32 accumulation); bias add; cast to output dtype.
    out = jnp.dot(h.astype(w2_ref.dtype), w2_ref[...],
                  preferred_element_type=jnp.float32)
    o_ref[...] = (out + b2_ref[...]).astype(o_ref.dtype)


@functools.partial(jax.jit, static_argnames=("block_b", "compute_dtype"))
def decoder_forward(x, w1, b1, w2, b2, *, block_b=1024,
                    compute_dtype=jnp.bfloat16):
    """x: (B, latent), w1: (latent, hidden), b1: (hidden,) or (1, hidden),
       w2: (hidden, input_dim), b2: (input_dim,) or (1, input_dim)
       -> (B, input_dim)."""
    B, latent = x.shape
    hidden, input_dim = w2.shape
    assert w1.shape == (latent, hidden)
    out_dtype = x.dtype

    # Lane-dense feature padding (e.g. hidden 100->128, input_dim 32->128).
    hid_p = _round_up(hidden, _LANE)
    out_p = _round_up(input_dim, _LANE)

    # Batch tile: multiple of 8 sublanes, capped at block_b rows per step.
    tb = min(block_b, _round_up(B, _SUBLANE))
    b_p = _round_up(B, tb)

    # Zero-padding is mathematically inert through ReLU and the second matmul.
    xp = jnp.pad(x, ((0, b_p - B), (0, 0))).astype(compute_dtype)
    w1p = jnp.pad(w1, ((0, 0), (0, hid_p - hidden))).astype(compute_dtype)
    b1p = jnp.pad(b1.reshape(1, -1),
                  ((0, 0), (0, hid_p - hidden))).astype(jnp.float32)
    w2p = jnp.pad(w2, ((0, hid_p - hidden),
                       (0, out_p - input_dim))).astype(compute_dtype)
    b2p = jnp.pad(b2.reshape(1, -1),
                  ((0, 0), (0, out_p - input_dim))).astype(jnp.float32)

    grid = (b_p // tb,)

    # VMEM budget: double-buffered x/out tiles + resident weights/biases
    # + f32 intermediates, with 2x headroom; capped below v7x's 64 MiB.
    csize = jnp.dtype(compute_dtype).itemsize
    osize = jnp.dtype(out_dtype).itemsize
    vmem_est = (2 * (tb * latent * csize + tb * out_p * osize)      # x / out
                + 2 * ((latent * hid_p + hid_p * out_p) * csize     # weights
                       + (hid_p + out_p) * 4)                        # biases
                + tb * hid_p * 4 + tb * out_p * 4)                   # f32 tmp
    vmem_limit = int(min(max(2 * vmem_est, 16 * 1024 * 1024),
                         48 * 1024 * 1024))

    flops = 2 * b_p * (latent * hid_p + hid_p * out_p)
    bytes_accessed = (xp.size * csize + w1p.size * csize + w2p.size * csize
                      + b1p.size * 4 + b2p.size * 4 + b_p * out_p * osize)

    out_padded = pl.pallas_call(
        decoder_kernel,
        out_shape=jax.ShapeDtypeStruct((b_p, out_p), out_dtype),
        grid=grid,
        in_specs=[
            pl.BlockSpec((tb, latent), lambda i: (i, 0)),     # x: batch-tiled
            pl.BlockSpec((latent, hid_p), lambda i: (0, 0)),  # w1: resident
            pl.BlockSpec((1, hid_p), lambda i: (0, 0)),       # b1: resident
            pl.BlockSpec((hid_p, out_p), lambda i: (0, 0)),   # w2: resident
            pl.BlockSpec((1, out_p), lambda i: (0, 0)),       # b2: resident
        ],
        out_specs=pl.BlockSpec((tb, out_p), lambda i: (i, 0)),
        compiler_params=pltpu.CompilerParams(
            dimension_semantics=("parallel",),
            vmem_limit_bytes=vmem_limit,
        ),
        cost_estimate=pl.CostEstimate(
            flops=flops, transcendentals=0, bytes_accessed=bytes_accessed),
    )(xp, w1p, b1p, w2p, b2p)

    return out_padded[:B, :input_dim]


def init_linear_params(key, in_features, out_features, dtype=jnp.float32):
    # Mimics PyTorch nn.Linear default init: U(-1/sqrt(in), 1/sqrt(in)).
    kw, kb = jax.random.split(key)
    bound = 1.0 / float(jnp.sqrt(jnp.array(in_features, jnp.float32)))
    # Stored as (in, out) so the kernel computes x @ W (== x @ W_pt.T).
    w = jax.random.uniform(kw, (in_features, out_features), dtype,
                           minval=-bound, maxval=bound)
    b = jax.random.uniform(kb, (1, out_features), dtype,
                           minval=-bound, maxval=bound)
    return w, b


def _reference(x, w1, b1, w2, b2):
    hp = jax.lax.Precision.HIGHEST
    h = jnp.maximum(jnp.dot(x, w1, precision=hp) + b1, 0.0)
    return jnp.dot(h, w2, precision=hp) + b2


if __name__ == "__main__":
    # Small shapes consistent with the module defaults.
    batch = 8
    latent_dim = 10
    hidden_dim = 100
    input_dim = 32

    key = jax.random.PRNGKey(0)
    k_x, k_l1, k_l2 = jax.random.split(key, 3)

    x = jax.random.normal(k_x, (batch, latent_dim), jnp.float32)
    w1, b1 = init_linear_params(k_l1, latent_dim, hidden_dim)
    w2, b2 = init_linear_params(k_l2, hidden_dim, input_dim)

    ref = _reference(x, w1, b1, w2, b2)

    # Default (bf16 compute, f32 accumulation) path.
    out_bf16 = jax.block_until_ready(decoder_forward(x, w1, b1, w2, b2))
    assert out_bf16.shape == (batch, input_dim)
    assert jnp.allclose(out_bf16, ref, atol=1e-1, rtol=1e-1)

    # Full-f32 compute path (tight check of kernel structure / padding logic).
    out_f32 = jax.block_until_ready(
        decoder_forward(x, w1, b1, w2, b2, compute_dtype=jnp.float32))
    assert out_f32.shape == (batch, input_dim)
    assert jnp.allclose(out_f32, ref, atol=1e-4, rtol=1e-4)

    print("KERNEL_OK")
</pallas_src>

<mosaic_0001>
module attributes {stable_mosaic.version = 11 : i64} {
  func.func @decoder_kernel(%arg0: i32, %arg1: memref<8x10xbf16, #tpu.memory_space<vmem>>, %arg2: memref<10x128xbf16, #tpu.memory_space<vmem>>, %arg3: memref<1x128xf32, #tpu.memory_space<vmem>>, %arg4: memref<128x128xbf16, #tpu.memory_space<vmem>>, %arg5: memref<1x128xf32, #tpu.memory_space<vmem>>, %arg6: memref<8x128xf32, #tpu.memory_space<vmem>>) attributes {dimension_semantics = [#tpu.dimension_semantics<parallel>], iteration_bounds = array<i64: 1>, scalar_prefetch = 0 : i64, scratch_operands = 0 : i64, tpu.core_type = #tpu.core_type<tc>, window_params = [{transform_indices = @transform_0, window_bounds = array<i64: 8, 10>}, {pipeline_mode = #tpu.pipeline_mode<synchronous>, transform_indices = @transform_1, window_bounds = array<i64: 10, 128>}, {pipeline_mode = #tpu.pipeline_mode<synchronous>, transform_indices = @transform_2, window_bounds = array<i64: 1, 128>}, {pipeline_mode = #tpu.pipeline_mode<synchronous>, transform_indices = @transform_3, window_bounds = array<i64: 128, 128>}, {pipeline_mode = #tpu.pipeline_mode<synchronous>, transform_indices = @transform_4, window_bounds = array<i64: 1, 128>}, {transform_indices = @transform_5, window_bounds = array<i64: 8, 128>}]} {
    %c0 = arith.constant 0 : index
    %c0_0 = arith.constant 0 : index
    %0 = vector.load %arg1[%c0, %c0_0] : memref<8x10xbf16, #tpu.memory_space<vmem>>, vector<8x10xbf16>
    %c0_1 = arith.constant 0 : index
    %c0_2 = arith.constant 0 : index
    %1 = vector.load %arg2[%c0_1, %c0_2] : memref<10x128xbf16, #tpu.memory_space<vmem>>, vector<10x128xbf16>
    %cst = arith.constant dense<0.000000e+00> : vector<8x128xf32>
    %2 = tpu.matmul %0, %1, %cst {dimension_numbers = #tpu.dot_dimension_numbers<[1], [0], [0], [1], [0, 0, 1, 1], [], []>} : vector<8x10xbf16>, vector<10x128xbf16>, vector<8x128xf32> -> vector<8x128xf32>
    %c0_3 = arith.constant 0 : index
    %c0_4 = arith.constant 0 : index
    %3 = vector.load %arg3[%c0_3, %c0_4] : memref<1x128xf32, #tpu.memory_space<vmem>>, vector<1x128xf32>
    %4 = vector.broadcast %3 : vector<1x128xf32> to vector<8x128xf32>
    %5 = arith.addf %2, %4 : vector<8x128xf32>
    %cst_5 = arith.constant 0.000000e+00 : f32
    %6 = vector.broadcast %cst_5 : f32 to vector<8x128xf32>
    %7 = arith.maximumf %5, %6 : vector<8x128xf32>
    %8 = arith.truncf %7 : vector<8x128xf32> to vector<8x128xbf16>
    %c0_6 = arith.constant 0 : index
    %c0_7 = arith.constant 0 : index
    %9 = vector.load %arg4[%c0_6, %c0_7] : memref<128x128xbf16, #tpu.memory_space<vmem>>, vector<128x128xbf16>
    %cst_8 = arith.constant dense<0.000000e+00> : vector<8x128xf32>
    %10 = tpu.matmul %8, %9, %cst_8 {dimension_numbers = #tpu.dot_dimension_numbers<[1], [0], [0], [1], [0, 0, 1, 1], [], []>} : vector<8x128xbf16>, vector<128x128xbf16>, vector<8x128xf32> -> vector<8x128xf32>
    %c0_9 = arith.constant 0 : index
    %c0_10 = arith.constant 0 : index
    %11 = vector.load %arg5[%c0_9, %c0_10] : memref<1x128xf32, #tpu.memory_space<vmem>>, vector<1x128xf32>
    %12 = vector.broadcast %11 : vector<1x128xf32> to vector<8x128xf32>
    %13 = arith.addf %10, %12 : vector<8x128xf32>
    %c0_11 = arith.constant 0 : index
    %c0_12 = arith.constant 0 : index
    %14 = vector.load %arg6[%c0_11, %c0_12] : memref<8x128xf32, #tpu.memory_space<vmem>>, vector<8x128xf32>
    tpu.vector_store %arg6[%c0_11, %c0_12], %13 {strides = array<i32>} : memref<8x128xf32, #tpu.memory_space<vmem>>, vector<8x128xf32>,
    return
  }
  func.func @transform_0(%arg0: i32) -> (i32, i32) {
    %c0_i32 = arith.constant 0 : i32
    %c0_i32_0 = arith.constant 0 : i32
    return %arg0, %c0_i32 : i32, i32
  }
  func.func @transform_1(%arg0: i32) -> (i32, i32) {
    %c0_i32 = arith.constant 0 : i32
    %c0_i32_0 = arith.constant 0 : i32
    %c0_i32_1 = arith.constant 0 : i32
    return %c0_i32, %c0_i32_0 : i32, i32
  }
  func.func @transform_2(%arg0: i32) -> (i32, i32) {
    %c0_i32 = arith.constant 0 : i32
    %c0_i32_0 = arith.constant 0 : i32
    %c0_i32_1 = arith.constant 0 : i32
    return %c0_i32, %c0_i32_0 : i32, i32
  }
  func.func @transform_3(%arg0: i32) -> (i32, i32) {
    %c0_i32 = arith.constant 0 : i32
    %c0_i32_0 = arith.constant 0 : i32
    %c0_i32_1 = arith.constant 0 : i32
    return %c0_i32, %c0_i32_0 : i32, i32
  }
  func.func @transform_4(%arg0: i32) -> (i32, i32) {
    %c0_i32 = arith.constant 0 : i32
    %c0_i32_0 = arith.constant 0 : i32
    %c0_i32_1 = arith.constant 0 : i32
    return %c0_i32, %c0_i32_0 : i32, i32
  }
  func.func @transform_5(%arg0: i32) -> (i32, i32) {
    %c0_i32 = arith.constant 0 : i32
    %c0_i32_0 = arith.constant 0 : i32
    return %arg0, %c0_i32 : i32, i32
  }
}

</mosaic_0001>

<llo_original>
// kernel: decoder_forward.1
$region0: #{decoder_forward.1}
  #allocation0 [shape = 'u32[]', space=smem, size = 0x4, offset = 0x4, fixed_abs, tag = 'smem constant byte address 0x4 - core index']
  #allocation1 [shape = 'u32[144,128]{1,0:T(1,128)}', space=vmem, size = 0x12000, scoped, tag = 'internal scratch']
  %s0 = inlined_call_operand.vmem [shape: bf16[8,10], index: 0, kind: input, shape index: {}]
  %s1 = inlined_call_operand.vmem [shape: bf16[10,128], index: 1, kind: input, shape index: {}]
  %s2 = inlined_call_operand.vmem [shape: f32[1,128], index: 2, kind: input, shape index: {}]
  %s3 = inlined_call_operand.vmem [shape: bf16[128,128], index: 3, kind: input, shape index: {}]
  %s4 = inlined_call_operand.vmem [shape: f32[1,128], index: 4, kind: input, shape index: {}]
  %s5 = inlined_call_operand.hbm [shape: f32[8,128], index: 5, kind: output, shape index: {}]
  %s6 = sld [smem:[#allocation0]]
  $region30: #{decoder_forward.1} parent=0
    _
  %s8 = ssub.s32 1, %s6
  %s9 = scalar_select 0, %s8, %s6
  $region1: #{decoder_forward.1} parent=0
    #allocation2 [shape = 'u8[4096]{0}', space=vmem, size = 0x1000, scoped, tag = 'output window, operand 0, single buffered']
    #allocation3 [shape = 's32[1]{0}', space=sflag, size = 0x4, scoped, tag = 'scoped memory for decoder_forward.1']
    %10 = vsyncpa [#allocation3], 0
    // Predicated region
    $region2: #{decoder_forward.1} parent=1 // pred_check
      _
    $region3: #{decoder_forward.1} parent=1 // pred_check_branch
      %12 = sbr.rel (0) target = $region5
    $region4: #{decoder_forward.1} parent=1 // pred_region
      _
    $region5: #{decoder_forward.1} parent=1 // pred_fallthru
      _
    // Predicated region
    $region6: #{decoder_forward.1} parent=1 // pred_check
      _
    $region7: #{decoder_forward.1} parent=1 // pred_check_branch
      %14 = sbr.rel (0) target = $region9
    $region8: #{decoder_forward.1} parent=1 // pred_region
      _
    $region9: #{decoder_forward.1} parent=1 // pred_fallthru
      _
    // Predicated region
    $region10: #{decoder_forward.1} parent=1 // pred_check
      _
    $region11: #{decoder_forward.1} parent=1 // pred_check_branch
      %16 = sbr.rel (0) target = $region13
    $region12: #{decoder_forward.1} parent=1 // pred_region
      _
    $region13: #{decoder_forward.1} parent=1 // pred_fallthru
      _
    // Predicated region
    $region14: #{decoder_forward.1} parent=1 // pred_check
      _
    $region15: #{decoder_forward.1} parent=1 // pred_check_branch
      %18 = sbr.rel (0) target = $region17
    $region16: #{decoder_forward.1} parent=1 // pred_region
      _
    $region17: #{decoder_forward.1} parent=1 // pred_fallthru
      _
    // Predicated region
    $region18: #{decoder_forward.1} parent=1 // pred_check
      _
    $region19: #{decoder_forward.1} parent=1 // pred_check_branch
      %20 = sbr.rel (0) target = $region21
    $region20: #{decoder_forward.1} parent=1 // pred_region
      _
    $region21: #{decoder_forward.1} parent=1 // pred_fallthru
      _
    %v22 = vld [vmem:[%s0] sm:$0xf]
    %v23 = vld [vmem:[%s1] sm:$0xf]
    %v24 = vld [vmem:[%s1 + $0x4] sm:$0x1]
    %v25 = vld [vmem:[%s2] sm:$0x1]
    %v27 = vlaneseq
    %v28 = vshrl.u32 %v27, 7
    %v29 = vsub.s32 0, %v28
    %v30 = vrot.slane %v25, %v29
    %v34 = vunpack.c.l.b16 %v23
    %v35 = vunpack.c.l.b16 %v24
    %v36 = vpack.c.b16 %v35, %v34
    %vm37 = vcmask 80896
    %v39 = vsel %vm37, %v22, 0
    %vm41 = vcmask 1044480
    %v43 = vsel %vm41, %v36, 0
    %45 = vmatprep.subr.bf16.mxu0 0
    %46 = vmatpush1.bf16.msra.mxu0 %v43
    %47 = vmatprep.subr.bf16.mxu0 0
    %48 = vmatpush1.bf16.msra.mxu0 0
    %49 = vmatprep.subr.bf16.mxu0 0
    %50 = vmatpush1.bf16.msra.mxu0 0
    %51 = vmatprep.subr.bf16.mxu0 0
    %52 = vmatpush1.bf16.msra.mxu0 0
    %53 = vmatprep.subr.bf16.mxu0 0
    %54 = vmatpush1.bf16.msra.mxu0 0
    %55 = vmatprep.subr.bf16.mxu0 0
    %56 = vmatpush1.bf16.msra.mxu0 0
    %57 = vmatprep.subr.bf16.mxu0 0
    %58 = vmatpush1.bf16.msra.mxu0 0
    %59 = vmatprep.subr.bf16.mxu0 0
    %60 = vmatpush1.bf16.msra.mxu0 0
    %61 = vmatprep.subr.bf16.mxu0 0
    %62 = vmatpush1.bf16.msra.mxu0 0
    %63 = vmatprep.subr.bf16.mxu0 0
    %64 = vmatpush1.bf16.msra.mxu0 0
    %65 = vmatprep.subr.bf16.mxu0 0
    %66 = vmatpush1.bf16.msra.mxu0 0
    %67 = vmatprep.subr.bf16.mxu0 0
    %68 = vmatpush1.bf16.msra.mxu0 0
    %69 = vmatprep.subr.bf16.mxu0 0
    %70 = vmatpush1.bf16.msra.mxu0 0
    %71 = vmatprep.subr.bf16.mxu0 0
    %72 = vmatpush1.bf16.msra.mxu0 0
    %73 = vmatprep.subr.bf16.mxu0 0
    %74 = vmatpush1.bf16.msra.mxu0 0
    %75 = vmatprep.subr.bf16.mxu0 0
    %76 = vmatpush1.bf16.msra.mxu0 0
    %77 = vmatprep.mubr.bf16.mxu0 0
    %78 = vmatmul.mubr.bf16.gmra.mrb[0].mxu0 %v39
    %v79 = vpop.f32.mrb[0].mxu0
    %v80 = vadd.f32 %v30, %v79
    %v81 = vpop.f32.mrb[0].mxu0
    %v82 = vpop.f32.mrb[0].mxu0
    %v83 = vpop.f32.mrb[0].mxu0
    %84 = vdwg.mxu0
    %v85 = vmax.f32 %v80, 0.0
    %v86 = vpack.c.bf16 %v85, %v85
    %v87 = vld [vmem:[%s3] sm:$0xf]
    %v88 = vld [vmem:[%s3 + $0x4] sm:$0xf]
    %v89 = vld [vmem:[%s3 + $0x8] sm:$0xf]
    %v90 = vld [vmem:[%s3 + $0xc] sm:$0xf]
    %v91 = vld [vmem:[%s3 + $0x10] sm:$0xf]
    %v92 = vld [vmem:[%s3 + $0x14] sm:$0xf]
    %v93 = vld [vmem:[%s3 + $0x18] sm:$0xf]
    %v94 = vld [vmem:[%s3 + $0x1c] sm:$0xf]
    %v95 = vld [vmem:[%s3 + $0x20] sm:$0xf]
    %v96 = vld [vmem:[%s3 + $0x24] sm:$0xf]
    %v97 = vld [vmem:[%s3 + $0x28] sm:$0xf]
    %v98 = vld [vmem:[%s3 + $0x2c] sm:$0xf]
    %v99 = vld [vmem:[%s3 + $0x30] sm:$0xf]
    %v100 = vld [vmem:[%s3 + $0x34] sm:$0xf]
    %v101 = vld [vmem:[%s3 + $0x38] sm:$0xf]
    %v102 = vld [vmem:[%s3 + $0x3c] sm:$0xf]
    %v103 = vld [vmem:[%s4] sm:$0x1]
    %v105 = vlaneseq
    %v106 = vshrl.u32 %v105, 7
    %v107 = vsub.s32 0, %v106
    %v108 = vrot.slane %v103, %v107
    %v126 = vunpack.c.l.b16 %v87
    %v127 = vunpack.c.l.b16 %v88
    %v128 = vunpack.c.l.b16 %v89
    %v129 = vunpack.c.l.b16 %v90
    %v130 = vunpack.c.l.b16 %v91
    %v131 = vunpack.c.l.b16 %v92
    %v132 = vunpack.c.l.b16 %v93
    %v133 = vunpack.c.l.b16 %v94
    %v134 = vunpack.c.l.b16 %v95
    %v135 = vunpack.c.l.b16 %v96
    %v136 = vunpack.c.l.b16 %v97
    %v137 = vunpack.c.l.b16 %v98
    %v138 = vunpack.c.l.b16 %v99
    %v139 = vunpack.c.l.b16 %v100
    %v140 = vunpack.c.l.b16 %v101
    %v141 = vunpack.c.l.b16 %v102
    %v142 = vpack.c.b16 %v127, %v126
    %v143 = vpack.c.b16 %v129, %v128
    %v144 = vpack.c.b16 %v131, %v130
    %v145 = vpack.c.b16 %v133, %v132
    %v146 = vpack.c.b16 %v135, %v134
    %v147 = vpack.c.b16 %v137, %v136
    %v148 = vpack.c.b16 %v139, %v138
    %v149 = vpack.c.b16 %v141, %v140
    %158 = vmatprep.subr.bf16.mxu0 0
    %159 = vmatpush1.bf16.msra.mxu0 %v142
    %160 = vmatprep.subr.bf16.mxu0 0
    %161 = vmatpush1.bf16.msra.mxu0 %v143
    %162 = vmatprep.subr.bf16.mxu0 0
    %163 = vmatpush1.bf16.msra.mxu0 %v144
    %164 = vmatprep.subr.bf16.mxu0 0
    %165 = vmatpush1.bf16.msra.mxu0 %v145
    %166 = vmatprep.subr.bf16.mxu0 0
    %167 = vmatpush1.bf16.msra.mxu0 %v146
    %168 = vmatprep.subr.bf16.mxu0 0
    %169 = vmatpush1.bf16.msra.mxu0 %v147
    %170 = vmatprep.subr.bf16.mxu0 0
    %171 = vmatpush1.bf16.msra.mxu0 %v148
    %172 = vmatprep.subr.bf16.mxu0 0
    %173 = vmatpush1.bf16.msra.mxu0 %v149
    %174 = vmatprep.subr.bf16.mxu0 0
    %175 = vmatpush1.bf16.msra.mxu0 0
    %176 = vmatprep.subr.bf16.mxu0 0
    %177 = vmatpush1.bf16.msra.mxu0 0
    %178 = vmatprep.subr.bf16.mxu0 0
    %179 = vmatpush1.bf16.msra.mxu0 0
    %180 = vmatprep.subr.bf16.mxu0 0
    %181 = vmatpush1.bf16.msra.mxu0 0
    %182 = vmatprep.subr.bf16.mxu0 0
    %183 = vmatpush1.bf16.msra.mxu0 0
    %184 = vmatprep.subr.bf16.mxu0 0
    %185 = vmatpush1.bf16.msra.mxu0 0
    %186 = vmatprep.subr.bf16.mxu0 0
    %187 = vmatpush1.bf16.msra.mxu0 0
    %188 = vmatprep.subr.bf16.mxu0 0
    %189 = vmatpush1.bf16.msra.mxu0 0
    %190 = vmatprep.mubr.bf16.mxu0 0
    %191 = vmatmul.mubr.bf16.gmra.mrb[0].mxu0 %v86
    %v192 = vpop.f32.mrb[0].mxu0
    %v193 = vadd.f32 %v108, %v192
    %v194 = vpop.f32.mrb[0].mxu0
    %v195 = vpop.f32.mrb[0].mxu0
    %v196 = vpop.f32.mrb[0].mxu0
    %197 = vdwg.mxu0
    %198 = vst [vmem:[#allocation2] sm:$0xff] %v193
    // Predicated region
    $region22: #{decoder_forward.1} parent=1 // pred_check
      _
    $region23: #{decoder_forward.1} parent=1 // pred_check_branch
      %200 = sbr.rel (0) target = $region25
    $region24: #{decoder_forward.1} parent=1 // pred_region
      %s202 = ssub.s32 128, 128
      %203 = vsyncadd [#allocation3], %s202
      %s205 = sshll.u32 [#allocation2], 4
      %s206 = int_to_ptr.vmem [resolvable:$true] %s205
      %208 = dma.vmem_to_hbm [thread:$0]  %s206, 128, %s5, [#allocation3]
    $region25: #{decoder_forward.1} parent=1 // pred_fallthru
      _
    // Predicated region
    $region26: #{decoder_forward.1} parent=1 // pred_check
      _
    $region27: #{decoder_forward.1} parent=1 // pred_check_branch
      %210 = sbr.rel (0) target = $region29
    $region28: #{decoder_forward.1} parent=1 // pred_region
      %211 = dma.done [#allocation3], 128
    $region29: #{decoder_forward.1} parent=1 // pred_fallthru
      _
    %212 = vsyncpa [#allocation3], 1

</llo_original>
